<compile_context>
chip_gen: v5e
topology: v5e:2x2
jax: 0.10.0
libtpu: 0.0.40
codegen_flags: <defaults>
</compile_context>

<pallas_src>
import functools

import jax
import jax.numpy as jnp
from jax import lax
from jax.experimental import pallas as pl
from jax.experimental.pallas import tpu as pltpu

LANES = 128
SUBLANES = 8
SLAB = 64                        # rows accumulated per fori_loop iteration
MAX_TILE_ROWS = 4096             # 4096*128*4B = 2 MiB / input / pipeline buffer
MAX_ACC_COLS = 8192              # widest lane axis allowed for the accumulator
VMEM_BUDGET = 12 * 1024 * 1024   # input double-buffers; < v5e 16 MiB scoped default
NUM_CORES = 2                    # leading 'parallel' axis (v7x: 2 TCs; harmless on 1-TC chips)


def _nmae_partials_kernel(x_ref, y_ref, out_ref, *, rows_total, tile_rows, cols,
                          blocks_per_core, first_masked_block):
    """Accumulate per-core (8, cols) partial sums of |x - y| and |y|.

    out_ref block is (1, 2, 8, cols): slot 0 = numerator, slot 1 = denominator.
    The grid is (core, row_block); the output block index depends only on the
    core axis, so each core owns a resident accumulator slot (no races even
    though the core axis is 'parallel').
    """
    step = pl.program_id(1)

    @pl.when(step == 0)
    def _():
        out_ref[...] = jnp.zeros_like(out_ref)

    abs_blk = pl.program_id(0) * blocks_per_core + step
    row0 = abs_blk * tile_rows            # first global row covered by this block

    def add_group(r0, nrows, masked):
        # nrows is static (<= SUBLANES); r0 may be a traced offset.
        xs = x_ref[pl.ds(r0, nrows), :].astype(jnp.float32)
        ys = y_ref[pl.ds(r0, nrows), :].astype(jnp.float32)
        d = jnp.abs(xs - ys)
        t = jnp.abs(ys)
        if masked:
            rid = row0 + r0 + lax.broadcasted_iota(jnp.int32, (nrows, cols), 0)
            ok = rid < rows_total
            d = jnp.where(ok, d, 0.0)     # also discards NaN garbage in clipped rows
            t = jnp.where(ok, t, 0.0)
        out_ref[0, 0, :nrows, :] += d
        out_ref[0, 1, :nrows, :] += t

    def accumulate(masked):
        n_slabs = tile_rows // SLAB
        if n_slabs > 0:
            def body(g, carry):
                base = pl.multiple_of(g * SLAB, SLAB)
                for s in range(SLAB // SUBLANES):
                    add_group(base + s * SUBLANES, SUBLANES, masked)
                return carry
            lax.fori_loop(0, n_slabs, body, 0)
        # Static remainder rows (only on the small single full-extent block path).
        rem_start = n_slabs * SLAB
        rem = tile_rows - rem_start
        for s in range(rem // SUBLANES):
            add_group(rem_start + s * SUBLANES, SUBLANES, masked)
        tail = rem % SUBLANES
        if tail:
            add_group(tile_rows - tail, tail, masked)

    if first_masked_block is None:
        accumulate(masked=False)                   # every block is full: never mask
    elif first_masked_block <= 0:
        accumulate(masked=True)                    # every block may be partial
    else:
        @pl.when(abs_blk < first_masked_block)     # full tiles: cheap unmasked path
        def _():
            accumulate(masked=False)

        @pl.when(abs_blk >= first_masked_block)    # ragged / phantom blocks only
        def _():
            accumulate(masked=True)


def _free_2d_view(a):
    """Copy-free 2-D (rows, cols) view of `a`, or None if it would need a pad."""
    n = a.size
    if n % LANES == 0:
        return a.reshape(n // LANES, LANES)
    # Lane-ragged: merge trailing (contiguous) dims into the lane axis until it
    # spans at least one full lane tile.  Pure dim merges are free reshapes.
    c = 1
    lead = list(a.shape)
    while lead and c < LANES:
        c *= lead.pop()
    if not lead:
        c = n          # everything merged -> a single row
    r = n // c
    if c > MAX_ACC_COLS:
        return None    # accumulator would be huge; caller takes the pad fallback
    return a.reshape(r, c)


def nmae_loss(input_arr: jax.Array, target_arr: jax.Array, reduction: str = "mean"):
    """Normalized Mean Absolute Error: ||input - target||_1 / ||target||_1.

    'mean' and 'sum' reductions give the same scalar (as in the PyTorch module).
    """
    if input_arr.shape != target_arr.shape:
        raise ValueError("input and target must have the same shape")
    if reduction not in ("mean", "sum"):
        # TODO(synk): reduction='none' (elementwise |u-v| / mean(|v|)) not implemented.
        raise NotImplementedError("Only 'mean'/'sum' reductions are supported.")

    n = input_arr.size
    x2 = _free_2d_view(input_arr)
    if x2 is None:
        # TODO(synk): huge lane-ragged 1-D inputs still take one pad copy; a fully
        # copy-free path would need manual DMA from the flat HBM buffers.
        pad = (-n) % LANES
        x2 = jnp.pad(input_arr.reshape(-1), (0, pad)).reshape(-1, LANES)
        y2 = jnp.pad(target_arr.reshape(-1), (0, pad)).reshape(-1, LANES)
    else:
        y2 = _free_2d_view(target_arr)

    rows, cols = x2.shape

    # Tile-row selection: multiple of SLAB, capped by MAX_TILE_ROWS and by a VMEM
    # budget (2 inputs x 2 pipeline buffers) that stays under v5e's 16 MiB default.
    lane_cols = -(-cols // LANES) * LANES
    per_row_bytes = 2 * lane_cols * (x2.dtype.itemsize + y2.dtype.itemsize)
    rows_by_vmem = max(SLAB, (VMEM_BUDGET // per_row_bytes) // SLAB * SLAB)
    if rows >= SLAB:
        tile_rows = int(min(MAX_TILE_ROWS, rows_by_vmem, (rows // SLAB) * SLAB))
    else:
        tile_rows = rows                       # single full-extent block

    n_row_blocks = -(-rows // tile_rows)
    blocks_per_core = -(-n_row_blocks // NUM_CORES)
    total_blocks = NUM_CORES * blocks_per_core

    if rows % tile_rows != 0:
        first_masked_block = n_row_blocks - 1  # last real block is ragged
    elif total_blocks > n_row_blocks:
        first_masked_block = n_row_blocks      # only phantom block(s) need masking
    else:
        first_masked_block = None              # no masking anywhere

    last_block = n_row_blocks - 1

    def in_index(c, i):
        # Clamp phantom block ids so the DMA never walks off the array; the
        # kernel masks those rows to zero anyway.
        return (jnp.minimum(c * blocks_per_core + i, last_block), 0)

    kernel = functools.partial(
        _nmae_partials_kernel,
        rows_total=rows,
        tile_rows=tile_rows,
        cols=cols,
        blocks_per_core=blocks_per_core,
        first_masked_block=first_masked_block,
    )

    partials = pl.pallas_call(
        kernel,
        out_shape=jax.ShapeDtypeStruct((NUM_CORES, 2, SUBLANES, cols), jnp.float32),
        grid_spec=pltpu.PrefetchScalarGridSpec(
            num_scalar_prefetch=0,
            grid=(NUM_CORES, blocks_per_core),
            in_specs=[
                pl.BlockSpec((tile_rows, cols), in_index),
                pl.BlockSpec((tile_rows, cols), in_index),
            ],
            # One resident accumulator slot per core (constant across the inner axis).
            out_specs=pl.BlockSpec((1, 2, SUBLANES, cols), lambda c, i: (c, 0, 0, 0)),
        ),
        compiler_params=pltpu.CompilerParams(
            dimension_semantics=("parallel", "arbitrary"),
        ),
    )(x2, y2)

    num = jnp.sum(partials[:, 0])
    den = jnp.sum(partials[:, 1])
    # NOTE: den == 0 gives inf/nan, matching the PyTorch / pure-JAX reference.
    return (num / den).astype(jnp.float32)


def nmae_loss_ref(input_arr, target_arr):
    """Pure-JAX reference (mirrors the PyTorch module)."""
    u = input_arr.astype(jnp.float32)
    v = target_arr.astype(jnp.float32)
    return jnp.mean(jnp.abs(u - v)) / jnp.mean(jnp.abs(v))


def _check(x, t):
    out = nmae_loss(x, t)
    jax.block_until_ready(out)
    ref = nmae_loss_ref(x, t)
    assert jnp.allclose(out, ref, rtol=1e-4, atol=1e-6), (out, ref)


if __name__ == "__main__":
    key = jax.random.PRNGKey(0)
    k1, k2, k3, k4, k5, k6, k7, k8 = jax.random.split(key, 8)

    # 1) Small NCHW example: lane-aligned, single full-extent block.
    _check(jax.random.normal(k1, (2, 4, 16, 16), dtype=jnp.float32),
           jax.random.normal(k2, (2, 4, 16, 16), dtype=jnp.float32))

    # 2) Lane-ragged shape: copy-free (400, 130) view, full slab-loop block on
    #    core 0 and a masked ragged block on core 1.
    _check(jax.random.normal(k3, (2, 4, 50, 130), dtype=jnp.float32),
           jax.random.normal(k4, (2, 4, 50, 130), dtype=jnp.float32))

    # 3) Lane-aligned but with a sub-8-row static tail (rows = 21).
    _check(jax.random.normal(k5, (3, 7, 128), dtype=jnp.float32),
           jax.random.normal(k6, (3, 7, 128), dtype=jnp.float32))

    # 4) 1-D lane-ragged input: single-row (1, 1000) copy-free view.
    _check(jax.random.normal(k7, (1000,), dtype=jnp.float32),
           jax.random.normal(k8, (1000,), dtype=jnp.float32))

    print("KERNEL_OK")
</pallas_src>

<mosaic_0001>
module attributes {stable_mosaic.version = 11 : i64} {
  func.func @_nmae_partials_kernel(%arg0: i32, %arg1: i32, %arg2: memref<16x128xf32, #tpu.memory_space<vmem>>, %arg3: memref<16x128xf32, #tpu.memory_space<vmem>>, %arg4: memref<1x2x8x128xf32, #tpu.memory_space<vmem>>) attributes {dimension_semantics = [#tpu.dimension_semantics<parallel>, #tpu.dimension_semantics<arbitrary>], iteration_bounds = array<i64: 2, 1>, scalar_prefetch = 0 : i64, scratch_operands = 0 : i64, tpu.core_type = #tpu.core_type<tc>, window_params = [{transform_indices = @transform_0, window_bounds = array<i64: 16, 128>}, {transform_indices = @transform_1, window_bounds = array<i64: 16, 128>}, {transform_indices = @transform_2, window_bounds = array<i64: 1, 2, 8, 128>}]} {
    %c0_i32 = arith.constant 0 : i32
    %0 = arith.cmpi eq, %arg1, %c0_i32 : i32
    %1 = arith.extui %0 : i1 to i32
    %c0_i32_0 = arith.constant 0 : i32
    %2 = arith.cmpi ne, %1, %c0_i32_0 : i32
    scf.if %2 {
      %cst = arith.constant 0.000000e+00 : f32
      %12 = vector.broadcast %cst : f32 to vector<1x2x8x128xf32>
      %c0 = arith.constant 0 : index
      %c0_5 = arith.constant 0 : index
      %c0_6 = arith.constant 0 : index
      %c0_7 = arith.constant 0 : index
      %13 = vector.load %arg4[%c0, %c0_5, %c0_6, %c0_7] : memref<1x2x8x128xf32, #tpu.memory_space<vmem>>, vector<1x2x8x128xf32>
      tpu.vector_store %arg4[%c0, %c0_5, %c0_6, %c0_7], %12 {strides = array<i32>} : memref<1x2x8x128xf32, #tpu.memory_space<vmem>>, vector<1x2x8x128xf32>,
    } else {
    }
    %c1_i32 = arith.constant 1 : i32
    %3 = arith.muli %arg0, %c1_i32 : i32
    %4 = arith.addi %3, %arg1 : i32
    %c16_i32 = arith.constant 16 : i32
    %5 = arith.muli %4, %c16_i32 : i32
    %c1_i32_1 = arith.constant 1 : i32
    %6 = arith.cmpi slt, %4, %c1_i32_1 : i32
    %7 = arith.extui %6 : i1 to i32
    %c0_i32_2 = arith.constant 0 : i32
    %8 = arith.cmpi ne, %7, %c0_i32_2 : i32
    scf.if %8 {
      %c0 = arith.constant 0 : index
      %c0_5 = arith.constant 0 : index
      %12 = vector.load %arg2[%c0, %c0_5] : memref<16x128xf32, #tpu.memory_space<vmem>>, vector<8x128xf32>
      %c0_6 = arith.constant 0 : index
      %c0_7 = arith.constant 0 : index
      %13 = vector.load %arg3[%c0_6, %c0_7] : memref<16x128xf32, #tpu.memory_space<vmem>>, vector<8x128xf32>
      %14 = arith.subf %12, %13 : vector<8x128xf32>
      %15 = math.absf %14 : vector<8x128xf32>
      %16 = math.absf %13 : vector<8x128xf32>
      %c0_8 = arith.constant 0 : index
      %c0_9 = arith.constant 0 : index
      %c0_10 = arith.constant 0 : index
      %c0_11 = arith.constant 0 : index
      %17 = vector.load %arg4[%c0_8, %c0_9, %c0_10, %c0_11] : memref<1x2x8x128xf32, #tpu.memory_space<vmem>>, vector<1x1x8x128xf32>
      %18 = vector.shape_cast %17 : vector<1x1x8x128xf32> to vector<8x128xf32>
      %19 = arith.addf %18, %15 : vector<8x128xf32>
      %c0_12 = arith.constant 0 : index
      %c0_13 = arith.constant 0 : index
      %c0_14 = arith.constant 0 : index
      %c0_15 = arith.constant 0 : index
      %20 = vector.load %arg4[%c0_12, %c0_13, %c0_14, %c0_15] : memref<1x2x8x128xf32, #tpu.memory_space<vmem>>, vector<1x1x8x128xf32>
      %21 = vector.shape_cast %20 : vector<1x1x8x128xf32> to vector<8x128xf32>
      %22 = vector.shape_cast %19 : vector<8x128xf32> to vector<1x1x8x128xf32>
      tpu.vector_store %arg4[%c0_12, %c0_13, %c0_14, %c0_15], %22 {strides = array<i32>} : memref<1x2x8x128xf32, #tpu.memory_space<vmem>>, vector<1x1x8x128xf32>,
      %c0_16 = arith.constant 0 : index
      %c1 = arith.constant 1 : index
      %c0_17 = arith.constant 0 : index
      %c0_18 = arith.constant 0 : index
      %23 = vector.load %arg4[%c0_16, %c1, %c0_17, %c0_18] : memref<1x2x8x128xf32, #tpu.memory_space<vmem>>, vector<1x1x8x128xf32>
      %24 = vector.shape_cast %23 : vector<1x1x8x128xf32> to vector<8x128xf32>
      %25 = arith.addf %24, %16 : vector<8x128xf32>
      %c0_19 = arith.constant 0 : index
      %c1_20 = arith.constant 1 : index
      %c0_21 = arith.constant 0 : index
      %c0_22 = arith.constant 0 : index
      %26 = vector.load %arg4[%c0_19, %c1_20, %c0_21, %c0_22] : memref<1x2x8x128xf32, #tpu.memory_space<vmem>>, vector<1x1x8x128xf32>
      %27 = vector.shape_cast %26 : vector<1x1x8x128xf32> to vector<8x128xf32>
      %28 = vector.shape_cast %25 : vector<8x128xf32> to vector<1x1x8x128xf32>
      tpu.vector_store %arg4[%c0_19, %c1_20, %c0_21, %c0_22], %28 {strides = array<i32>} : memref<1x2x8x128xf32, #tpu.memory_space<vmem>>, vector<1x1x8x128xf32>,
      %c8 = arith.constant 8 : index
      %c0_23 = arith.constant 0 : index
      %29 = vector.load %arg2[%c8, %c0_23] : memref<16x128xf32, #tpu.memory_space<vmem>>, vector<8x128xf32>
      %c8_24 = arith.constant 8 : index
      %c0_25 = arith.constant 0 : index
      %30 = vector.load %arg3[%c8_24, %c0_25] : memref<16x128xf32, #tpu.memory_space<vmem>>, vector<8x128xf32>
      %31 = arith.subf %29, %30 : vector<8x128xf32>
      %32 = math.absf %31 : vector<8x128xf32>
      %33 = math.absf %30 : vector<8x128xf32>
      %c0_26 = arith.constant 0 : index
      %c0_27 = arith.constant 0 : index
      %c0_28 = arith.constant 0 : index
      %c0_29 = arith.constant 0 : index
      %34 = vector.load %arg4[%c0_26, %c0_27, %c0_28, %c0_29] : memref<1x2x8x128xf32, #tpu.memory_space<vmem>>, vector<1x1x8x128xf32>
      %35 = vector.shape_cast %34 : vector<1x1x8x128xf32> to vector<8x128xf32>
      %36 = arith.addf %35, %32 : vector<8x128xf32>
      %c0_30 = arith.constant 0 : index
      %c0_31 = arith.constant 0 : index
      %c0_32 = arith.constant 0 : index
      %c0_33 = arith.constant 0 : index
      %37 = vector.load %arg4[%c0_30, %c0_31, %c0_32, %c0_33] : memref<1x2x8x128xf32, #tpu.memory_space<vmem>>, vector<1x1x8x128xf32>
      %38 = vector.shape_cast %37 : vector<1x1x8x128xf32> to vector<8x128xf32>
      %39 = vector.shape_cast %36 : vector<8x128xf32> to vector<1x1x8x128xf32>
      tpu.vector_store %arg4[%c0_30, %c0_31, %c0_32, %c0_33], %39 {strides = array<i32>} : memref<1x2x8x128xf32, #tpu.memory_space<vmem>>, vector<1x1x8x128xf32>,
      %c0_34 = arith.constant 0 : index
      %c1_35 = arith.constant 1 : index
      %c0_36 = arith.constant 0 : index
      %c0_37 = arith.constant 0 : index
      %40 = vector.load %arg4[%c0_34, %c1_35, %c0_36, %c0_37] : memref<1x2x8x128xf32, #tpu.memory_space<vmem>>, vector<1x1x8x128xf32>
      %41 = vector.shape_cast %40 : vector<1x1x8x128xf32> to vector<8x128xf32>
      %42 = arith.addf %41, %33 : vector<8x128xf32>
      %c0_38 = arith.constant 0 : index
      %c1_39 = arith.constant 1 : index
      %c0_40 = arith.constant 0 : index
      %c0_41 = arith.constant 0 : index
      %43 = vector.load %arg4[%c0_38, %c1_39, %c0_40, %c0_41] : memref<1x2x8x128xf32, #tpu.memory_space<vmem>>, vector<1x1x8x128xf32>
      %44 = vector.shape_cast %43 : vector<1x1x8x128xf32> to vector<8x128xf32>
      %45 = vector.shape_cast %42 : vector<8x128xf32> to vector<1x1x8x128xf32>
      tpu.vector_store %arg4[%c0_38, %c1_39, %c0_40, %c0_41], %45 {strides = array<i32>} : memref<1x2x8x128xf32, #tpu.memory_space<vmem>>, vector<1x1x8x128xf32>,
    } else {
    }
    %c1_i32_3 = arith.constant 1 : i32
    %9 = arith.cmpi sge, %4, %c1_i32_3 : i32
    %10 = arith.extui %9 : i1 to i32
    %c0_i32_4 = arith.constant 0 : i32
    %11 = arith.cmpi ne, %10, %c0_i32_4 : i32
    scf.if %11 {
      %c0 = arith.constant 0 : index
      %c0_5 = arith.constant 0 : index
      %12 = vector.load %arg2[%c0, %c0_5] : memref<16x128xf32, #tpu.memory_space<vmem>>, vector<8x128xf32>
      %c0_6 = arith.constant 0 : index
      %c0_7 = arith.constant 0 : index
      %13 = vector.load %arg3[%c0_6, %c0_7] : memref<16x128xf32, #tpu.memory_space<vmem>>, vector<8x128xf32>
      %14 = arith.subf %12, %13 : vector<8x128xf32>
      %15 = math.absf %14 : vector<8x128xf32>
      %16 = math.absf %13 : vector<8x128xf32>
      %c0_i32_8 = arith.constant 0 : i32
      %17 = arith.addi %5, %c0_i32_8 : i32
      %18 = tpu.iota {dimensions = array<i32: 0>} : vector<8x128xi32>
      %19 = vector.broadcast %17 : i32 to vector<8x128xi32>
      %20 = arith.addi %19, %18 : vector<8x128xi32>
      %c16_i32_9 = arith.constant 16 : i32
      %21 = vector.broadcast %c16_i32_9 : i32 to vector<8x128xi32>
      %22 = arith.cmpi slt, %20, %21 : vector<8x128xi32>
      %cst = arith.constant 0.000000e+00 : f32
      %23 = vector.broadcast %cst : f32 to vector<8x128xf32>
      %24 = arith.select %22, %15, %23 : vector<8x128xi1>, vector<8x128xf32>
      %cst_10 = arith.constant 0.000000e+00 : f32
      %25 = vector.broadcast %cst_10 : f32 to vector<8x128xf32>
      %26 = arith.select %22, %16, %25 : vector<8x128xi1>, vector<8x128xf32>
      %c0_11 = arith.constant 0 : index
      %c0_12 = arith.constant 0 : index
      %c0_13 = arith.constant 0 : index
      %c0_14 = arith.constant 0 : index
      %27 = vector.load %arg4[%c0_11, %c0_12, %c0_13, %c0_14] : memref<1x2x8x128xf32, #tpu.memory_space<vmem>>, vector<1x1x8x128xf32>
      %28 = vector.shape_cast %27 : vector<1x1x8x128xf32> to vector<8x128xf32>
      %29 = arith.addf %28, %24 : vector<8x128xf32>
      %c0_15 = arith.constant 0 : index
      %c0_16 = arith.constant 0 : index
      %c0_17 = arith.constant 0 : index
      %c0_18 = arith.constant 0 : index
      %30 = vector.load %arg4[%c0_15, %c0_16, %c0_17, %c0_18] : memref<1x2x8x128xf32, #tpu.memory_space<vmem>>, vector<1x1x8x128xf32>
      %31 = vector.shape_cast %30 : vector<1x1x8x128xf32> to vector<8x128xf32>
      %32 = vector.shape_cast %29 : vector<8x128xf32> to vector<1x1x8x128xf32>
      tpu.vector_store %arg4[%c0_15, %c0_16, %c0_17, %c0_18], %32 {strides = array<i32>} : memref<1x2x8x128xf32, #tpu.memory_space<vmem>>, vector<1x1x8x128xf32>,
      %c0_19 = arith.constant 0 : index
      %c1 = arith.constant 1 : index
      %c0_20 = arith.constant 0 : index
      %c0_21 = arith.constant 0 : index
      %33 = vector.load %arg4[%c0_19, %c1, %c0_20, %c0_21] : memref<1x2x8x128xf32, #tpu.memory_space<vmem>>, vector<1x1x8x128xf32>
      %34 = vector.shape_cast %33 : vector<1x1x8x128xf32> to vector<8x128xf32>
      %35 = arith.addf %34, %26 : vector<8x128xf32>
      %c0_22 = arith.constant 0 : index
      %c1_23 = arith.constant 1 : index
      %c0_24 = arith.constant 0 : index
      %c0_25 = arith.constant 0 : index
      %36 = vector.load %arg4[%c0_22, %c1_23, %c0_24, %c0_25] : memref<1x2x8x128xf32, #tpu.memory_space<vmem>>, vector<1x1x8x128xf32>
      %37 = vector.shape_cast %36 : vector<1x1x8x128xf32> to vector<8x128xf32>
      %38 = vector.shape_cast %35 : vector<8x128xf32> to vector<1x1x8x128xf32>
      tpu.vector_store %arg4[%c0_22, %c1_23, %c0_24, %c0_25], %38 {strides = array<i32>} : memref<1x2x8x128xf32, #tpu.memory_space<vmem>>, vector<1x1x8x128xf32>,
      %c8 = arith.constant 8 : index
      %c0_26 = arith.constant 0 : index
      %39 = vector.load %arg2[%c8, %c0_26] : memref<16x128xf32, #tpu.memory_space<vmem>>, vector<8x128xf32>
      %c8_27 = arith.constant 8 : index
      %c0_28 = arith.constant 0 : index
      %40 = vector.load %arg3[%c8_27, %c0_28] : memref<16x128xf32, #tpu.memory_space<vmem>>, vector<8x128xf32>
      %41 = arith.subf %39, %40 : vector<8x128xf32>
      %42 = math.absf %41 : vector<8x128xf32>
      %43 = math.absf %40 : vector<8x128xf32>
      %c8_i32 = arith.constant 8 : i32
      %44 = arith.addi %5, %c8_i32 : i32
      %45 = tpu.iota {dimensions = array<i32: 0>} : vector<8x128xi32>
      %46 = vector.broadcast %44 : i32 to vector<8x128xi32>
      %47 = arith.addi %46, %45 : vector<8x128xi32>
      %c16_i32_29 = arith.constant 16 : i32
      %48 = vector.broadcast %c16_i32_29 : i32 to vector<8x128xi32>
      %49 = arith.cmpi slt, %47, %48 : vector<8x128xi32>
      %cst_30 = arith.constant 0.000000e+00 : f32
      %50 = vector.broadcast %cst_30 : f32 to vector<8x128xf32>
      %51 = arith.select %49, %42, %50 : vector<8x128xi1>, vector<8x128xf32>
      %cst_31 = arith.constant 0.000000e+00 : f32
      %52 = vector.broadcast %cst_31 : f32 to vector<8x128xf32>
      %53 = arith.select %49, %43, %52 : vector<8x128xi1>, vector<8x128xf32>
      %c0_32 = arith.constant 0 : index
      %c0_33 = arith.constant 0 : index
      %c0_34 = arith.constant 0 : index
      %c0_35 = arith.constant 0 : index
      %54 = vector.load %arg4[%c0_32, %c0_33, %c0_34, %c0_35] : memref<1x2x8x128xf32, #tpu.memory_space<vmem>>, vector<1x1x8x128xf32>
      %55 = vector.shape_cast %54 : vector<1x1x8x128xf32> to vector<8x128xf32>
      %56 = arith.addf %55, %51 : vector<8x128xf32>
      %c0_36 = arith.constant 0 : index
      %c0_37 = arith.constant 0 : index
      %c0_38 = arith.constant 0 : index
      %c0_39 = arith.constant 0 : index
      %57 = vector.load %arg4[%c0_36, %c0_37, %c0_38, %c0_39] : memref<1x2x8x128xf32, #tpu.memory_space<vmem>>, vector<1x1x8x128xf32>
      %58 = vector.shape_cast %57 : vector<1x1x8x128xf32> to vector<8x128xf32>
      %59 = vector.shape_cast %56 : vector<8x128xf32> to vector<1x1x8x128xf32>
      tpu.vector_store %arg4[%c0_36, %c0_37, %c0_38, %c0_39], %59 {strides = array<i32>} : memref<1x2x8x128xf32, #tpu.memory_space<vmem>>, vector<1x1x8x128xf32>,
      %c0_40 = arith.constant 0 : index
      %c1_41 = arith.constant 1 : index
      %c0_42 = arith.constant 0 : index
      %c0_43 = arith.constant 0 : index
      %60 = vector.load %arg4[%c0_40, %c1_41, %c0_42, %c0_43] : memref<1x2x8x128xf32, #tpu.memory_space<vmem>>, vector<1x1x8x128xf32>
      %61 = vector.shape_cast %60 : vector<1x1x8x128xf32> to vector<8x128xf32>
      %62 = arith.addf %61, %53 : vector<8x128xf32>
      %c0_44 = arith.constant 0 : index
      %c1_45 = arith.constant 1 : index
      %c0_46 = arith.constant 0 : index
      %c0_47 = arith.constant 0 : index
      %63 = vector.load %arg4[%c0_44, %c1_45, %c0_46, %c0_47] : memref<1x2x8x128xf32, #tpu.memory_space<vmem>>, vector<1x1x8x128xf32>
      %64 = vector.shape_cast %63 : vector<1x1x8x128xf32> to vector<8x128xf32>
      %65 = vector.shape_cast %62 : vector<8x128xf32> to vector<1x1x8x128xf32>
      tpu.vector_store %arg4[%c0_44, %c1_45, %c0_46, %c0_47], %65 {strides = array<i32>} : memref<1x2x8x128xf32, #tpu.memory_space<vmem>>, vector<1x1x8x128xf32>,
    } else {
    }
    return
  }
  func.func @transform_0(%arg0: i32, %arg1: i32) -> (i32, i32) {
    %c1_i32 = arith.constant 1 : i32
    %0 = arith.muli %arg0, %c1_i32 : i32
    %1 = arith.addi %0, %arg1 : i32
    %c0_i32 = arith.constant 0 : i32
    %2 = arith.minsi %1, %c0_i32 : i32
    %c0_i32_0 = arith.constant 0 : i32
    %c0_i32_1 = arith.constant 0 : i32
    return %2, %c0_i32_0 : i32, i32
  }
  func.func @transform_1(%arg0: i32, %arg1: i32) -> (i32, i32) {
    %c1_i32 = arith.constant 1 : i32
    %0 = arith.muli %arg0, %c1_i32 : i32
    %1 = arith.addi %0, %arg1 : i32
    %c0_i32 = arith.constant 0 : i32
    %2 = arith.minsi %1, %c0_i32 : i32
    %c0_i32_0 = arith.constant 0 : i32
    %c0_i32_1 = arith.constant 0 : i32
    return %2, %c0_i32_0 : i32, i32
  }
  func.func @transform_2(%arg0: i32, %arg1: i32) -> (i32, i32, i32, i32) {
    %c0_i32 = arith.constant 0 : i32
    %c0_i32_0 = arith.constant 0 : i32
    %c0_i32_1 = arith.constant 0 : i32
    %c0_i32_2 = arith.constant 0 : i32
    return %arg0, %c0_i32, %c0_i32_0, %c0_i32_1 : i32, i32, i32, i32
  }
}

</mosaic_0001>

<llo_original>
// kernel: tpu_custom_call.1
$region0: #{tpu_custom_call.1}
  #allocation0 [shape = 'u32[]', space=smem, size = 0x4, offset = 0x4, fixed_abs, tag = 'smem constant byte address 0x4 - core index']
  #allocation1 [shape = 'u32[72,128]{1,0:T(1,128)}', space=vmem, size = 0x9000, scoped, tag = 'internal scratch']
  %s0 = inlined_call_operand.hbm [shape: f32[16,128], index: 0, kind: input, shape index: {}]
  %s1 = inlined_call_operand.hbm [shape: f32[16,128], index: 1, kind: input, shape index: {}]
  %s2 = inlined_call_operand.hbm [shape: f32[2,2,8,128], index: 2, kind: output, shape index: {}]
  %s3 = sld [smem:[#allocation0]]
  $region61: #{tpu_custom_call.1} parent=0
    _
  %s5 = ssub.s32 1, %s3
  %s6 = scalar_select 0, %s5, %s3
  $region1: #{tpu_custom_call.1} parent=0
    #allocation2 [shape = 'u8[16384]{0}', space=vmem, size = 0x4000, scoped, tag = 'input window, operand 0']
    #allocation3 [shape = 's32[2]{0}', space=sflag, size = 0x8, scoped, tag = 'scoped memory for tpu_custom_call.1']
    #allocation4 [shape = 's32[2]{0}', space=sflag, size = 0x8, scoped, tag = 'scoped memory for tpu_custom_call.1']
    #allocation5 [shape = 'u8[16384]{0}', space=vmem, size = 0x4000, scoped, tag = 'input window, operand 1']
    #allocation6 [shape = 's32[2]{0}', space=sflag, size = 0x8, scoped, tag = 'scoped memory for tpu_custom_call.1']
    #allocation7 [shape = 'u8[16384]{0}', space=vmem, size = 0x4000, scoped, tag = 'output window, operand 0']
    %7 = vsyncpa [#allocation3], 0
    %s8 = scalar_lea.sflag [#allocation3], 1
    %9 = vsyncpa %s8, 0
    %10 = vsyncpa [#allocation6], 0
    %s11 = scalar_lea.sflag [#allocation6], 1
    %12 = vsyncpa %s11, 0
    %13 = vsyncpa [#allocation4], 0
    %s14 = scalar_lea.sflag [#allocation4], 1
    %15 = vsyncpa %s14, 0
    loop: start=0, step=1, limit=4
    $region2: #{tpu_custom_call.1} parent=1 // loop_pre_header
      _
    $region3: #{tpu_custom_call.1} parent=1 // loop_header
      %s17 = sphi 0, %s21
      %p18 = scmp.ge.s32.totalorder %s17, 4
      %s24 = sphi 0, %s36
      %s25 = sphi 0, %s32
      %s26 = sphi 0, %s24
      %s27 = sphi 0, %s25
      %s28 = sphi 0, %s26
      %s29 = sphi 0, %s27
      %s45 = sphi 0, %s47
      %s48 = sphi 0, %s45
      %s49 = sphi 0, %s48
      %s65 = sphi 0, %s49
      %s77 = sphi 0, %s79
      %s80 = sphi 0, %s77
      %s81 = sphi 0, %s80
      %s97 = sphi 0, %s81
      %s103 = sphi 0, %s105
      %s106 = sphi 0, %s103
      %s107 = sphi 0, %s106
      %s123 = sphi 0, %s107
    $region4: #{tpu_custom_call.1} parent=1 // loop_header_branch
      %20 = sbr.rel (%p18) target = $region8
    $region5: #{tpu_custom_call.1} parent=1 // loop_body
      %s22 = ssub.s32 %s17, 1
      %s23 = ssub.s32 %s17, 2
      %s30 = sadd.s32 1, %s25
      %p31 = scmp.ge.s32.totalorder %s30, 1
      %s32 = scalar_select %p31, 0, %s30
      %s33 = sadd.s32 1, %s24
      %s34 = scalar_select %p31, %s33, %s24
      %p35 = scmp.ge.s32.totalorder %s34, 2
      %s36 = scalar_select %p35, 0, %s34
      %s37 = sadd.s32 %s24, %s25
      %p38 = scmp.lt.s32.totalorder %s37, 0
      %s39 = scalar_select %p38, %s37, 0
      %s40 = sadd.s32 %s36, %s32
      %p41 = scmp.lt.s32.totalorder %s40, 0
      %s42 = scalar_select %p41, %s40, 0
      %s43 = ssub.s32 %s39, %s42
      %p44 = scmp.eq.s32.totalorder %s43, 0
      %s46 = sadd.s32 %s45, 1
      %s47 = scalar_select %p44, %s45, %s46
      %p50 = pneg %p44
      %p51 = scmp.eq.s32.totalorder %s17, 1
      %p52 = por %p50, %p51
      %p53 = scmp.ne.s32.totalorder %s45, %s48
      %p54 = scmp.eq.s32.totalorder %s17, 0
      %p55 = por %p53, %p54
      %p56 = scmp.ne.s32.totalorder %s45, %s48
      %p57 = scmp.eq.s32.totalorder %s22, 1
      %p58 = por %p56, %p57
      %p59 = scmp.ne.s32.totalorder %s48, %s49
      %p60 = scmp.eq.s32.totalorder %s22, 0
      %p61 = por %p59, %p60
      %p62 = scmp.ne.s32.totalorder %s48, %s49
      %p63 = scmp.eq.s32.totalorder %s23, 1
      %p64 = por %p62, %p63
      %p66 = scmp.ne.s32.totalorder %s49, %s65
      %p67 = scmp.eq.s32.totalorder %s23, 0
      %p68 = por %p66, %p67
      %s69 = sadd.s32 %s24, %s25
      %p70 = scmp.lt.s32.totalorder %s69, 0
      %s71 = scalar_select %p70, %s69, 0
      %s72 = sadd.s32 %s36, %s32
      %p73 = scmp.lt.s32.totalorder %s72, 0
      %s74 = scalar_select %p73, %s72, 0
      %s75 = ssub.s32 %s71, %s74
      %p76 = scmp.eq.s32.totalorder %s75, 0
      %s78 = sadd.s32 %s77, 1
      %s79 = scalar_select %p76, %s77, %s78
      %p82 = pneg %p76
      %p83 = scmp.eq.s32.totalorder %s17, 1
      %p84 = por %p82, %p83
      %p85 = scmp.ne.s32.totalorder %s77, %s80
      %p86 = scmp.eq.s32.totalorder %s17, 0
      %p87 = por %p85, %p86
      %p88 = scmp.ne.s32.totalorder %s77, %s80
      %p89 = scmp.eq.s32.totalorder %s22, 1
      %p90 = por %p88, %p89
      %p91 = scmp.ne.s32.totalorder %s80, %s81
      %p92 = scmp.eq.s32.totalorder %s22, 0
      %p93 = por %p91, %p92
      %p94 = scmp.ne.s32.totalorder %s80, %s81
      %p95 = scmp.eq.s32.totalorder %s23, 1
      %p96 = por %p94, %p95
      %p98 = scmp.ne.s32.totalorder %s81, %s97
      %p99 = scmp.eq.s32.totalorder %s23, 0
      %p100 = por %p98, %p99
      %s101 = ssub.s32 %s24, %s36
      %p102 = scmp.eq.s32.totalorder %s101, 0
      %s104 = sadd.s32 %s103, 1
      %s105 = scalar_select %p102, %s103, %s104
      %p108 = pneg %p102
      %p109 = scmp.eq.s32.totalorder %s17, 1
      %p110 = por %p108, %p109
      %p111 = scmp.ne.s32.totalorder %s103, %s106
      %p112 = scmp.eq.s32.totalorder %s17, 0
      %p113 = por %p111, %p112
      %p114 = scmp.ne.s32.totalorder %s103, %s106
      %p115 = scmp.eq.s32.totalorder %s22, 1
      %p116 = por %p114, %p115
      %p117 = scmp.ne.s32.totalorder %s106, %s107
      %p118 = scmp.eq.s32.totalorder %s22, 0
      %p119 = por %p117, %p118
      %p120 = scmp.ne.s32.totalorder %s106, %s107
      %p121 = scmp.eq.s32.totalorder %s23, 1
      %p122 = por %p120, %p121
      %p124 = scmp.ne.s32.totalorder %s107, %s123
      %p125 = scmp.eq.s32.totalorder %s23, 0
      %p126 = por %p124, %p125
      %p127 = scmp.le.s32.totalorder 1, %s17
      %p128 = scmp.lt.s32.totalorder %s17, 3
      %p129 = pnand %p127, %p128
      %p130 = pneg %p129
      // Predicated region
      $region9: #{tpu_custom_call.1} parent=5 // pred_check
        _
      $region10: #{tpu_custom_call.1} parent=5 // pred_check_branch
        %132 = sbr.rel (%p129) target = $region12
      $region11: #{tpu_custom_call.1} parent=5 // pred_region
        %s133 = ssub.s32 %s17, 1
      $region12: #{tpu_custom_call.1} parent=5 // pred_fallthru
        _
      %p134 = scmp.lt.s32.totalorder %s17, 2
      // Predicated region
      $region13: #{tpu_custom_call.1} parent=5 // pred_check
        %p135 = pneg %p134
      $region14: #{tpu_custom_call.1} parent=5 // pred_check_branch
        %137 = sbr.rel (%p135) target = $region16
      $region15: #{tpu_custom_call.1} parent=5 // pred_region
        // Predicated region
        $region17: #{tpu_custom_call.1} parent=15 // pred_check
          %p138 = pneg %p55
        $region18: #{tpu_custom_call.1} parent=15 // pred_check_branch
          %140 = sbr.rel (%p138) target = $region20
        $region19: #{tpu_custom_call.1} parent=15 // pred_region
          %s141 = sand.u32 %s45, 1
          %s142 = scalar_lea.sflag [#allocation3], %s141
          %s143 = sand.u32 %s45, 1
          %s144 = smul.addr %s143, 16
          %s145 = scalar_lea.vmem [#allocation2], %s144
          %s146 = sadd.s32 %s24, %s25
          %p147 = scmp.lt.s32.totalorder %s146, 0
          %s148 = scalar_select %p147, %s146, 0
          %s149 = smul.u32 2, %s148
          %151 = vsyncadd %s142, 0
          %s152 = smul.addr %s149, 8
          %s153 = scalar_lea.hbm %s0, %s152
          %s154 = sshll.u32 %s153, 4
          %s155 = int_to_ptr.hbm [resolvable:$true] %s154
          %s156 = sshll.u32 %s145, 4
          %s157 = int_to_ptr.vmem [resolvable:$true] %s156
          %162 = dma.hbm_to_vmem [thread:$0]  %s155, 256, %s157, %s142, 128, 128, 8
        $region20: #{tpu_custom_call.1} parent=15 // pred_fallthru
          _
        // Predicated region
        $region21: #{tpu_custom_call.1} parent=15 // pred_check
          %p163 = pneg %p87
        $region22: #{tpu_custom_call.1} parent=15 // pred_check_branch
          %165 = sbr.rel (%p163) target = $region24
        $region23: #{tpu_custom_call.1} parent=15 // pred_region
          %s166 = sand.u32 %s77, 1
          %s167 = scalar_lea.sflag [#allocation6], %s166
          %s168 = sand.u32 %s77, 1
          %s169 = smul.addr %s168, 16
          %s170 = scalar_lea.vmem [#allocation5], %s169
          %s171 = sadd.s32 %s24, %s25
          %p172 = scmp.lt.s32.totalorder %s171, 0
          %s173 = scalar_select %p172, %s171, 0
          %s174 = smul.u32 2, %s173
          %176 = vsyncadd %s167, 0
          %s177 = smul.addr %s174, 8
          %s178 = scalar_lea.hbm %s1, %s177
          %s179 = sshll.u32 %s178, 4
          %s180 = int_to_ptr.hbm [resolvable:$true] %s179
          %s181 = sshll.u32 %s170, 4
          %s182 = int_to_ptr.vmem [resolvable:$true] %s181
          %187 = dma.hbm_to_vmem [thread:$0]  %s180, 256, %s182, %s167, 128, 128, 8
        $region24: #{tpu_custom_call.1} parent=15 // pred_fallthru
          _
      $region16: #{tpu_custom_call.1} parent=5 // pred_fallthru
        _
      %p188 = scmp.le.s32.totalorder 1, %s17
      %p189 = scmp.lt.s32.totalorder %s17, 3
      %p190 = pnand %p188, %p189
      %p191 = pneg %p190
      // Predicated region
      $region25: #{tpu_custom_call.1} parent=5 // pred_check
        _
      $region26: #{tpu_custom_call.1} parent=5 // pred_check_branch
        %193 = sbr.rel (%p190) target = $region28
      $region27: #{tpu_custom_call.1} parent=5 // pred_region
        %s194 = ssub.s32 %s17, 1
        %s195 = sand.u32 %s48, 1
        %s196 = scalar_lea.sflag [#allocation3], %s195
        %s197 = sand.u32 %s48, 1
        %s198 = smul.addr %s197, 16
        %s199 = scalar_lea.vmem [#allocation2], %s198
        // Predicated region
        $region29: #{tpu_custom_call.1} parent=27 // pred_check
          %p200 = pneg %p61
        $region30: #{tpu_custom_call.1} parent=27 // pred_check_branch
          %202 = sbr.rel (%p200) target = $region32
        $region31: #{tpu_custom_call.1} parent=27 // pred_region
          %204 = dma.done %s196, 256
        $region32: #{tpu_custom_call.1} parent=27 // pred_fallthru
          _
        %s205 = sand.u32 %s80, 1
        %s206 = scalar_lea.sflag [#allocation6], %s205
        %s207 = sand.u32 %s80, 1
        %s208 = smul.addr %s207, 16
        %s209 = scalar_lea.vmem [#allocation5], %s208
        // Predicated region
        $region33: #{tpu_custom_call.1} parent=27 // pred_check
          %p210 = pneg %p93
        $region34: #{tpu_custom_call.1} parent=27 // pred_check_branch
          %212 = sbr.rel (%p210) target = $region36
        $region35: #{tpu_custom_call.1} parent=27 // pred_region
          %214 = dma.done %s206, 256
        $region36: #{tpu_custom_call.1} parent=27 // pred_fallthru
          _
        %s215 = sand.u32 %s48, 1
        %s216 = scalar_lea.sflag [#allocation3], %s215
        %s217 = sand.u32 %s48, 1
        %s218 = smul.addr %s217, 16
        %s219 = scalar_lea.vmem [#allocation2], %s218
        %p220 = pneg %p61
        %p221 = pneg %p58
        %s222 = sand.u32 %s80, 1
        %s223 = scalar_lea.sflag [#allocation6], %s222
        %s224 = sand.u32 %s80, 1
        %s225 = smul.addr %s224, 16
        %s226 = scalar_lea.vmem [#allocation5], %s225
        %p227 = pneg %p93
        %p228 = pneg %p90
        %p229 = pneg %p119
        %p230 = pneg %p116
        %s231 = sand.u32 %s106, 1
        %s232 = scalar_lea.sflag [#allocation4], %s231
        %s233 = sand.u32 %s106, 1
        %s234 = smul.addr %s233, 16
        %s235 = scalar_lea.vmem [#allocation7], %s234
        %s236 = sadd.s32 %s26, %s27
        %p237 = scmp.lt.s32.totalorder %s236, 0
        %s238 = scalar_select %p237, %s236, 0
        %s239 = smul.u32 2, %s238
        %s240 = sadd.s32 %s26, %s27
        %p241 = scmp.lt.s32.totalorder %s240, 0
        %s242 = scalar_select %p241, %s240, 0
        %s243 = smul.u32 2, %s242
        %p244 = scmp.eq.s32.totalorder %s27, 0
        // Predicated region
        $region37: #{tpu_custom_call.1} parent=27 // pred_check
          %p245 = pneg %p244
        $region38: #{tpu_custom_call.1} parent=27 // pred_check_branch
          %247 = sbr.rel (%p245) target = $region40
        $region39: #{tpu_custom_call.1} parent=27 // pred_region
          %248 = vst [vmem:[%s235] sm:$0xff] 0.0
          %249 = vst [vmem:[%s235 + $0x8] sm:$0xff] 0.0
        $region40: #{tpu_custom_call.1} parent=27 // pred_fallthru
          _
        %s250 = sadd.s32 %s26, %s27
        %s251 = smul.u32 %s250, 16
        %p252 = scmp.lt.s32.totalorder %s250, 1
        // Predicated region
        $region41: #{tpu_custom_call.1} parent=27 // pred_check
          %p253 = pneg %p252
        $region42: #{tpu_custom_call.1} parent=27 // pred_check_branch
          %255 = sbr.rel (%p253) target = $region44
        $region43: #{tpu_custom_call.1} parent=27 // pred_region
          %v256 = vld [vmem:[%s199] sm:$0xff]
          %v257 = vld [vmem:[%s209] sm:$0xff]
          %v258 = vsub.f32 %v256, %v257
          %v259 = vand.u32 2147483647, %v258
          %v260 = vand.u32 2147483647, %v257
          %v261 = vld [vmem:[%s235] sm:$0xff]
          %v262 = vadd.f32 %v261, %v259
          %263 = vst [vmem:[%s235] sm:$0xff] %v262
          %s264 = scalar_lea.vmem %s235, 8 [#allocation7]
          %v265 = vld [vmem:[%s264] sm:$0xff]
          %v266 = vadd.f32 %v265, %v260
          %267 = vst [vmem:[%s264] sm:$0xff] %v266
          %v268 = vld [vmem:[%s199 + $0x8] sm:$0xff]
          %v269 = vld [vmem:[%s209 + $0x8] sm:$0xff]
          %v270 = vsub.f32 %v268, %v269
          %v271 = vand.u32 2147483647, %v270
          %v272 = vand.u32 2147483647, %v269
          %v273 = vld [vmem:[%s235] sm:$0xff]
          %v274 = vadd.f32 %v273, %v271
          %275 = vst [vmem:[%s235] sm:$0xff] %v274
          %v276 = vld [vmem:[%s264] sm:$0xff]
          %v277 = vadd.f32 %v276, %v272
          %278 = vst [vmem:[%s264] sm:$0xff] %v277
        $region44: #{tpu_custom_call.1} parent=27 // pred_fallthru
          _
        %p279 = scmp.ge.s32.totalorder %s250, 1
        // Predicated region
        $region45: #{tpu_custom_call.1} parent=27 // pred_check
          %p280 = pneg %p279
        $region46: #{tpu_custom_call.1} parent=27 // pred_check_branch
          %282 = sbr.rel (%p280) target = $region48
        $region47: #{tpu_custom_call.1} parent=27 // pred_region
          %v283 = vld [vmem:[%s199] sm:$0xff]
          %v284 = vld [vmem:[%s209] sm:$0xff]
          %v285 = vsub.f32 %v283, %v284
          %v286 = vand.u32 2147483647, %v285
          %v287 = vand.u32 2147483647, %v284
          %v288 = vlaneseq
          %v289 = vshrl.u32 %v288, 7
          %v290 = vstv %s251
          %v291 = vadd.s32 %v290, %v289
          %vm292 = vcmp.lt.s32.totalorder %v291, 16
          %v293 = vsel %vm292, %v286, 0.0
          %v294 = vsel %vm292, %v287, 0.0
          %v295 = vld [vmem:[%s235] sm:$0xff]
          %v296 = vadd.f32 %v295, %v293
          %297 = vst [vmem:[%s235] sm:$0xff] %v296
          %s298 = scalar_lea.vmem %s235, 8 [#allocation7]
          %v299 = vld [vmem:[%s298] sm:$0xff]
          %v300 = vadd.f32 %v299, %v294
          %301 = vst [vmem:[%s298] sm:$0xff] %v300
          %v302 = vld [vmem:[%s199 + $0x8] sm:$0xff]
          %v303 = vld [vmem:[%s209 + $0x8] sm:$0xff]
          %v304 = vsub.f32 %v302, %v303
          %v305 = vand.u32 2147483647, %v304
          %v306 = vand.u32 2147483647, %v303
          %s307 = sadd.s32 %s251, 8
          %v308 = vstv %s307
          %v309 = vadd.s32 %v308, %v289
          %vm310 = vcmp.lt.s32.totalorder %v309, 16
          %v311 = vsel %vm310, %v305, 0.0
          %v312 = vsel %vm310, %v306, 0.0
          %v313 = vld [vmem:[%s235] sm:$0xff]
          %v314 = vadd.f32 %v313, %v311
          %315 = vst [vmem:[%s235] sm:$0xff] %v314
          %v316 = vld [vmem:[%s298] sm:$0xff]
          %v317 = vadd.f32 %v316, %v312
          %318 = vst [vmem:[%s298] sm:$0xff] %v317
        $region48: #{tpu_custom_call.1} parent=27 // pred_fallthru
          _
        %s319 = sand.u32 %s106, 1
        %s320 = scalar_lea.sflag [#allocation4], %s319
        %s321 = sand.u32 %s106, 1
        %s322 = smul.addr %s321, 16
        %s323 = scalar_lea.vmem [#allocation7], %s322
        // Predicated region
        $region49: #{tpu_custom_call.1} parent=27 // pred_check
          %p324 = pneg %p116
        $region50: #{tpu_custom_call.1} parent=27 // pred_check_branch
          %326 = sbr.rel (%p324) target = $region52
        $region51: #{tpu_custom_call.1} parent=27 // pred_region
          %328 = vsyncadd %s320, 0
          %s329 = smul.addr %s26, 2
          %s330 = smul.addr %s329, 8
          %s331 = scalar_lea.hbm %s2, %s330
          %s332 = sshll.u32 %s323, 4
          %s333 = int_to_ptr.vmem [resolvable:$true] %s332
          %s334 = sshll.u32 %s331, 4
          %s335 = int_to_ptr.hbm [resolvable:$true] %s334
          %340 = dma.vmem_to_hbm [thread:$0]  %s333, 256, %s335, %s320, 128, 128, 8
        $region52: #{tpu_custom_call.1} parent=27 // pred_fallthru
          _
      $region28: #{tpu_custom_call.1} parent=5 // pred_fallthru
        _
      %p341 = scmp.le.s32.totalorder 2, %s17
      // Predicated region
      $region53: #{tpu_custom_call.1} parent=5 // pred_check
        %p342 = pneg %p341
      $region54: #{tpu_custom_call.1} parent=5 // pred_check_branch
        %344 = sbr.rel (%p342) target = $region56
      $region55: #{tpu_custom_call.1} parent=5 // pred_region
        %s345 = ssub.s32 %s17, 2
        // Predicated region
        $region57: #{tpu_custom_call.1} parent=55 // pred_check
          %p346 = pneg %p122
        $region58: #{tpu_custom_call.1} parent=55 // pred_check_branch
          %348 = sbr.rel (%p346) target = $region60
        $region59: #{tpu_custom_call.1} parent=55 // pred_region
          %s349 = sand.u32 %s107, 1
          %s350 = scalar_lea.sflag [#allocation4], %s349
          %s351 = sand.u32 %s107, 1
          %s352 = smul.addr %s351, 16
          %s353 = scalar_lea.vmem [#allocation7], %s352
          %355 = dma.done %s350, 256
        $region60: #{tpu_custom_call.1} parent=55 // pred_fallthru
          _
      $region56: #{tpu_custom_call.1} parent=5 // pred_fallthru
        _
    $region6: #{tpu_custom_call.1} parent=1 // loop_footer
      %s21 = sadd.s32 1, %s17
    $region7: #{tpu_custom_call.1} parent=1 // loop_footer_branch
      %16 = sbr.rel target = $region3
    $region8: #{tpu_custom_call.1} parent=1 // loop_exit
      _
    %356 = vsyncpa [#allocation3], 1
    %s357 = scalar_lea.sflag [#allocation3], 1
    %358 = vsyncpa %s357, 1
    %359 = vsyncpa [#allocation6], 1
    %s360 = scalar_lea.sflag [#allocation6], 1
    %361 = vsyncpa %s360, 1
    %362 = vsyncpa [#allocation4], 1
    %s363 = scalar_lea.sflag [#allocation4], 1
    %364 = vsyncpa %s363, 1

</llo_original>
